<compile_context>
chip_gen: v7x
topology: tpu7x:2x2x1
jax: 0.10.0
libtpu: 0.0.40
codegen_flags: <defaults>
</compile_context>

<pallas_src>
import jax
import jax.numpy as jnp
from jax.experimental import pallas as pl
from jax.experimental.pallas import tpu as pltpu


def _swish_kernel(x_ref, o_ref):
    x = x_ref[...].astype(jnp.float32)
    o_ref[...] = (x * jax.nn.sigmoid(x)).astype(o_ref.dtype)


def _compiler_params(block_bytes):
    # 2 arrays x 2 pipeline buffers per block, plus headroom.  Default blocks
    # (8 MiB) request ~40 MiB, which fits v7x's 64 MiB per-TC VMEM and is well
    # under v5e/v6e's 128 MiB.
    vmem = 4 * block_bytes + (8 << 20)
    vmem = max(32 << 20, min(vmem, 96 << 20))
    return pltpu.CompilerParams(
        dimension_semantics=("parallel",),   # megacore / dual-TC sharding
        vmem_limit_bytes=vmem,
    )


def swish(x, *, target_block_bytes=8 << 20, min_pallas_bytes=256 << 10,
          donate_input=False):
    """Elementwise swish: x * sigmoid(x). Matches the PyTorch forward."""
    orig_shape = x.shape
    orig_dtype = x.dtype
    n = int(x.size)
    itemsize = jnp.dtype(orig_dtype).itemsize
    total_bytes = n * itemsize

    # Tiny tensors: pallas_call launch + DMA setup dominates; XLA's fused
    # elementwise is strictly better there.
    if n == 0 or total_bytes < min_pallas_bytes:
        return x * jax.nn.sigmoid(x)

    # Native sublane tile: 8 rows for 32-bit, 16 for 16-bit, 32 for 8-bit.
    row_mult = max(8, 32 // itemsize)

    cost = pl.CostEstimate(flops=5 * n, transcendentals=n,
                           bytes_accessed=2 * total_bytes)
    io_alias = {0: 0} if donate_input else {}

    # Widest lane-dense last dim in {4096..128} that divides n exactly
    # (no padding needed in the common NCHW case).
    lane = None
    for cand in (4096, 2048, 1024, 512, 256, 128):
        if n % cand == 0:
            lane = cand
            break

    if lane is not None:
        # ---- main path: contiguous 2-D view, full-width unmasked stores ----
        rows = n // lane
        x2d = x.reshape(rows, lane)

        rows_per_block = max(
            row_mult,
            (target_block_bytes // (lane * itemsize)) // row_mult * row_mult)

        if rows <= rows_per_block:
            if rows >= 2 * row_mult:
                # Whole tensor fits in one block: split into 2 so both v7x
                # TensorCores get work instead of one idling (up to 2x).
                rows_per_block = pl.cdiv(pl.cdiv(rows, 2), row_mult) * row_mult
            else:
                rows_per_block = rows          # full-extent block (always legal)
        else:
            nblk = pl.cdiv(rows, rows_per_block)
            if nblk % 2:
                # Nudge to an even block count so the 2 TCs split evenly.
                cand_rows = pl.cdiv(pl.cdiv(rows, nblk + 1), row_mult) * row_mult
                if cand_rows >= row_mult:
                    rows_per_block = cand_rows

        block_bytes = rows_per_block * lane * itemsize
        grid = (pl.cdiv(rows, rows_per_block),)

        out = pl.pallas_call(
            _swish_kernel,
            out_shape=jax.ShapeDtypeStruct((rows, lane), orig_dtype),
            grid_spec=pltpu.PrefetchScalarGridSpec(
                num_scalar_prefetch=0,
                grid=grid,
                in_specs=[pl.BlockSpec((rows_per_block, lane), lambda i: (i, 0))],
                out_specs=pl.BlockSpec((rows_per_block, lane), lambda i: (i, 0)),
            ),
            compiler_params=_compiler_params(block_bytes),
            cost_estimate=cost,
            input_output_aliases=io_alias,
        )(x2d)
        return out.reshape(orig_shape)

    # ---- ragged path: 1-D flat view, Pallas masks the partial last block ----
    # (Safe: each output element depends only on its own input; out-of-bounds
    # writes of the last block are dropped.)  No wrapper-side pad / slice.
    mult = row_mult * 128                       # keep blocks tile-aligned
    x1d = x.reshape(-1)
    block = max(mult, (target_block_bytes // itemsize) // mult * mult)
    if pl.cdiv(n, block) == 1 and n >= 2 * mult:
        block = pl.cdiv(pl.cdiv(n, 2), mult) * mult   # give both TCs work
    block_bytes = block * itemsize
    grid = (pl.cdiv(n, block),)

    out = pl.pallas_call(
        _swish_kernel,
        out_shape=jax.ShapeDtypeStruct((n,), orig_dtype),
        grid_spec=pltpu.PrefetchScalarGridSpec(
            num_scalar_prefetch=0,
            grid=grid,
            in_specs=[pl.BlockSpec((block,), lambda i: (i,))],
            out_specs=pl.BlockSpec((block,), lambda i: (i,)),
        ),
        compiler_params=_compiler_params(block_bytes),
        cost_estimate=cost,
        input_output_aliases=io_alias,
    )(x1d)
    return out.reshape(orig_shape)


if __name__ == "__main__":
    key = jax.random.PRNGKey(0)
    # Small NCHW input consistent with the module's forward.
    x = jax.random.normal(key, (2, 4, 16, 16), dtype=jnp.float32)

    y_ref = x * jax.nn.sigmoid(x)

    # Force the Pallas path (the default small-input fast path would otherwise
    # route this tiny demo tensor through plain XLA).
    y = swish(x, min_pallas_bytes=0)
    jax.block_until_ready(y)
    assert y.shape == x.shape and y.dtype == x.dtype
    assert jnp.allclose(y, y_ref, atol=1e-6, rtol=1e-6)

    # Default call (small-input fast path) must also match.
    y_fast = swish(x)
    jax.block_until_ready(y_fast)
    assert jnp.allclose(y_fast, y_ref, atol=1e-6, rtol=1e-6)

    print("KERNEL_OK")
</pallas_src>

<mosaic_0001>
module attributes {stable_mosaic.version = 11 : i64} {
  func.func @_swish_kernel(%arg0: i32, %arg1: memref<1x2048xf32, #tpu.memory_space<vmem>>, %arg2: memref<1x2048xf32, #tpu.memory_space<vmem>>) attributes {dimension_semantics = [#tpu.dimension_semantics<parallel>], iteration_bounds = array<i64: 1>, scalar_prefetch = 0 : i64, scratch_operands = 0 : i64, tpu.core_type = #tpu.core_type<tc>, window_params = [{transform_indices = @transform_0, window_bounds = array<i64: 1, 2048>}, {transform_indices = @transform_1, window_bounds = array<i64: 1, 2048>}]} {
    %c0 = arith.constant 0 : index
    %c0_0 = arith.constant 0 : index
    %0 = vector.load %arg1[%c0, %c0_0] : memref<1x2048xf32, #tpu.memory_space<vmem>>, vector<1x2048xf32>
    %1 = arith.negf %0 : vector<1x2048xf32>
    %2 = math.exp %1 : vector<1x2048xf32>
    %cst = arith.constant 1.000000e+00 : f32
    %3 = vector.broadcast %cst : f32 to vector<1x2048xf32>
    %4 = arith.addf %3, %2 : vector<1x2048xf32>
    %5 = arith.divf %3, %4 : vector<1x2048xf32>
    %6 = arith.mulf %0, %5 : vector<1x2048xf32>
    %c0_1 = arith.constant 0 : index
    %c0_2 = arith.constant 0 : index
    %7 = vector.load %arg2[%c0_1, %c0_2] : memref<1x2048xf32, #tpu.memory_space<vmem>>, vector<1x2048xf32>
    tpu.vector_store %arg2[%c0_1, %c0_2], %6 {strides = array<i32>} : memref<1x2048xf32, #tpu.memory_space<vmem>>, vector<1x2048xf32>,
    return
  }
  func.func @transform_0(%arg0: i32) -> (i32, i32) {
    %c0_i32 = arith.constant 0 : i32
    %c0_i32_0 = arith.constant 0 : i32
    return %arg0, %c0_i32 : i32, i32
  }
  func.func @transform_1(%arg0: i32) -> (i32, i32) {
    %c0_i32 = arith.constant 0 : i32
    %c0_i32_0 = arith.constant 0 : i32
    return %arg0, %c0_i32 : i32, i32
  }
}

</mosaic_0001>

<llo_original>
// kernel: tpu_custom_call.1
$region0: #{tpu_custom_call.1}
  #allocation0 [shape = 'u32[]', space=smem, size = 0x4, offset = 0x4, fixed_abs, tag = 'smem constant byte address 0x4 - core index']
  #allocation1 [shape = 'u32[144,128]{1,0:T(1,128)}', space=vmem, size = 0x12000, scoped, tag = 'internal scratch']
  %s0 = inlined_call_operand.hbm [shape: f32[1,2048], index: 0, kind: input, shape index: {}]
  %s1 = inlined_call_operand.hbm [shape: f32[1,2048], index: 1, kind: output, shape index: {}]
  %s2 = sld [smem:[#allocation0]]
  $region18: #{tpu_custom_call.1} parent=0
    _
  %s4 = ssub.s32 1, %s2
  %s5 = scalar_select 0, %s4, %s2
  $region1: #{tpu_custom_call.1} parent=0
    #allocation2 [shape = 'u8[8192]{0}', space=vmem, size = 0x2000, scoped, tag = 'input window, operand 0, single buffered']
    #allocation3 [shape = 's32[1]{0}', space=sflag, size = 0x4, scoped, tag = 'scoped memory for tpu_custom_call.1']
    #allocation4 [shape = 's32[1]{0}', space=sflag, size = 0x4, scoped, tag = 'scoped memory for tpu_custom_call.1']
    #allocation5 [shape = 'u8[8192]{0}', space=vmem, size = 0x2000, scoped, tag = 'output window, operand 0, single buffered']
    %6 = vsyncpa [#allocation3], 0
    %7 = vsyncpa [#allocation4], 0
    // Predicated region
    $region2: #{tpu_custom_call.1} parent=1 // pred_check
      _
    $region3: #{tpu_custom_call.1} parent=1 // pred_check_branch
      %9 = sbr.rel (0) target = $region5
    $region4: #{tpu_custom_call.1} parent=1 // pred_region
      %s11 = ssub.s32 256, 256
      %12 = vsyncadd [#allocation3], %s11
      %s14 = sshll.u32 [#allocation2], 4
      %s15 = int_to_ptr.vmem [resolvable:$true] %s14
      %17 = dma.hbm_to_vmem [thread:$0]  %s0, 256, %s15, [#allocation3]
    $region5: #{tpu_custom_call.1} parent=1 // pred_fallthru
      _
    // Predicated region
    $region6: #{tpu_custom_call.1} parent=1 // pred_check
      _
    $region7: #{tpu_custom_call.1} parent=1 // pred_check_branch
      %19 = sbr.rel (0) target = $region9
    $region8: #{tpu_custom_call.1} parent=1 // pred_region
      %20 = dma.done [#allocation3], 256
    $region9: #{tpu_custom_call.1} parent=1 // pred_fallthru
      _
    %v21 = vld [vmem:[#allocation2] sm:$0xff]
    %v22 = vld [vmem:[#allocation2 + $0x8] sm:$0xff]
    %v23 = vxor.u32 %v21, 2147483648
    %v24 = vxor.u32 %v22, 2147483648
    %v25 = vmul.f32 %v23, 1.442695
    %v26 = vpow.pop %v25
    %v27 = vmul.f32 %v24, 1.442695
    %v28 = vpow.pop %v27
    %v29 = vadd.f32 %v26, 1.0
    %v30 = vadd.f32 %v28, 1.0
    %v31 = vrcp.pop %v29
    %v32 = vmul.f32 1.0, %v31
    %v33 = vrcp.pop %v30
    %v34 = vmul.f32 1.0, %v33
    %v35 = vmul.f32 %v21, %v32
    %v36 = vmul.f32 %v22, %v34
    %37 = vst [vmem:[#allocation5] sm:$0xff] %v35
    %38 = vst [vmem:[#allocation5 + $0x8] sm:$0xff] %v36
    // Predicated region
    $region10: #{tpu_custom_call.1} parent=1 // pred_check
      _
    $region11: #{tpu_custom_call.1} parent=1 // pred_check_branch
      %40 = sbr.rel (0) target = $region13
    $region12: #{tpu_custom_call.1} parent=1 // pred_region
      %s42 = ssub.s32 256, 256
      %43 = vsyncadd [#allocation4], %s42
      %s45 = sshll.u32 [#allocation5], 4
      %s46 = int_to_ptr.vmem [resolvable:$true] %s45
      %48 = dma.vmem_to_hbm [thread:$0]  %s46, 256, %s1, [#allocation4]
    $region13: #{tpu_custom_call.1} parent=1 // pred_fallthru
      _
    // Predicated region
    $region14: #{tpu_custom_call.1} parent=1 // pred_check
      _
    $region15: #{tpu_custom_call.1} parent=1 // pred_check_branch
      %50 = sbr.rel (0) target = $region17
    $region16: #{tpu_custom_call.1} parent=1 // pred_region
      %51 = dma.done [#allocation4], 256
    $region17: #{tpu_custom_call.1} parent=1 // pred_fallthru
      _
    %52 = vsyncpa [#allocation3], 1
    %53 = vsyncpa [#allocation4], 1

</llo_original>
